<compile_context>
chip_gen: v7x
topology: tpu7x:2x2x1
jax: 0.10.0
libtpu: 0.0.40
codegen_flags: <defaults>
</compile_context>

<pallas_src>
import numpy as np
import jax
import jax.numpy as jnp
from jax import lax
from jax.experimental import pallas as pl
from jax.experimental.pallas import tpu as pltpu

GEOMETRIES = ('cvar', 'chi-square')
MIN_REL_DIFFERENCE = 1e-05

_LANES = 128
_SUBLANES = 8
# float32 bisection: the bracket stops changing after ~50 halvings, so capping
# the loop at 64 is semantically equivalent to the reference's max_iter=1000.
_MAX_BISECT_ITERS = 64
# Safety cap for the (normally 0..few iterations) bracket-expansion loop.
_MAX_EXPAND_ITERS = 128


def _slab_shape(m):
    rows = pl.cdiv(m, _LANES)
    rows = max(_SUBLANES, ((rows + _SUBLANES - 1) // _SUBLANES) * _SUBLANES)
    return rows, _LANES


def _to_slab(v, m):
    """Pad v (length m) with -inf and reshape to a lane/sublane-dense 2-D slab."""
    rows, cols = _slab_shape(m)
    v32 = v.astype(jnp.float32).reshape(m)
    pad = rows * cols - m
    if pad:
        v32 = jnp.pad(v32, (0, pad), constant_values=-jnp.inf)
    return v32.reshape(rows, cols)


def _valid_mask(rows, cols, m):
    rix = lax.broadcasted_iota(jnp.int32, (rows, cols), 0)
    cix = lax.broadcasted_iota(jnp.int32, (rows, cols), 1)
    return (rix * cols + cix) < m


def _make_best_response_kernel(m, rows, cols, geometry, size, reg, tol, max_iter):
    """Builds a Pallas kernel computing best_response(v) for a static config."""
    m_f = float(m)
    size_f = float(size)
    reg_f = float(reg)
    tol_f = float(tol)
    max_iter_eff = max(1, int(min(int(max_iter), _MAX_BISECT_ITERS)))

    def kernel(v_ref, p_ref):
        v = v_ref[...]                      # (rows, cols) f32, padding = -inf
        v_max = jnp.max(v)                  # -inf padding is neutral for max

        degenerate = None

        # ---- per-geometry target / p(eta) / analytic bracket (hoisted) ----
        if geometry == 'cvar':
            inv_reg = jnp.float32(1.0 / reg_f)
            inv_size = jnp.float32(1.0 / size_f)
            inv_m = jnp.float32(1.0 / m_f)
            v_over_reg = v * inv_reg        # hoisted: only eta-dependent work remains in target

            def target(eta):
                x = v_over_reg - eta * inv_reg
                return 1.0 - jnp.sum(jnp.minimum(jnp.exp(x), inv_size)) * inv_m

            def p_fn(eta):
                x = v_over_reg - eta * inv_reg
                return jnp.minimum(jnp.exp(x), inv_size) * inv_m

            # eta_min = reg * logsumexp(v/reg - log m)   (padding contributes 0)
            z = v_over_reg - jnp.float32(np.log(m_f))
            z_max = jnp.max(z)
            eta_min0 = reg_f * (z_max + jnp.log(jnp.sum(jnp.exp(z - z_max))))
            eta_max0 = v_max

            lower0 = target(eta_min0)
            upper0 = target(eta_max0)
            # Reference early exit: |target(eta_min)| <= tol -> return p(eta_min).
            # Reuse lower0 for it; `skip` also disables both while loops below.
            skip = jnp.abs(lower0) <= tol_f

        else:  # chi-square
            valid = _valid_mask(rows, cols, m)
            v_min = jnp.min(jnp.where(valid, v, jnp.inf))
            v_sum = jnp.sum(jnp.where(valid, v, 0.0))

            # Reference check (v.max()-v.min())/v.max() <= MIN_REL_DIFFERENCE.
            # IEEE inf/nan comparisons give False just like torch; additionally
            # treat an exactly-constant vector as degenerate (safe completion
            # of the 0/0 corner, which still yields the uniform answer).
            degenerate = jnp.logical_or(
                (v_max - v_min) / v_max <= MIN_REL_DIFFERENCE,
                v_max == v_min)

            if size_f == float('inf'):
                inv_regm = jnp.float32(1.0 / (reg_f * m_f))   # compile-time constant

                def target(eta):
                    return 1.0 - jnp.sum(jnp.maximum(v - eta, 0.0)) * inv_regm

                def p_fn(eta):
                    return jnp.maximum(v - eta, 0.0) * inv_regm

                eta_min0 = jnp.minimum(v_sum - reg_f * m_f, v_min)
                eta_max0 = v_max
            elif reg_f == 0.0:
                # 0.5*mean((m*pp/sum(pp)-1)^2) - size
                #   == 0.5*(m*sum(pp^2)/sum(pp)^2 - 1) - size   (exact identity)
                lim = jnp.float32(0.5 * (m_f - 1.0) - size_f)  # eta -> v_max limit (single argmax)

                def target(eta):
                    pp = jnp.maximum(v - eta, 0.0)
                    s1 = jnp.sum(pp)
                    s2 = jnp.sum(pp * pp)
                    t = 0.5 * (m_f * s2 / (s1 * s1) - 1.0) - size_f
                    # avoid the reference's 0/0 NaN at eta >= v_max
                    return jnp.where(s1 > 0.0, t, lim)

                def p_fn(eta):
                    pp = jnp.maximum(v - eta, 0.0)
                    return pp / jnp.maximum(jnp.sum(pp), jnp.float32(1e-30))

                eta_min0 = jnp.float32(
                    -1.0 / (np.sqrt(2.0 * size_f + 1.0) - 1.0)) * v_max
                eta_max0 = v_max
            else:
                inv_denom = jnp.float32(1.0 / np.sqrt(m_f * (1.0 + 2.0 * size_f)))

                def _opt_lam(s2):
                    return jnp.maximum(jnp.float32(reg_f), jnp.sqrt(s2) * inv_denom)

                def target(eta):
                    pp = jnp.maximum(v - eta, 0.0)
                    s1 = jnp.sum(pp)
                    s2 = jnp.sum(pp * pp)
                    return 1.0 - s1 / (m_f * _opt_lam(s2))

                def p_fn(eta):
                    pp = jnp.maximum(v - eta, 0.0)
                    s2 = jnp.sum(pp * pp)
                    return pp * (1.0 / (m_f * _opt_lam(s2)))

                eta_min0 = v_min - 1.0
                eta_max0 = v_max

            lower0 = target(eta_min0)
            upper0 = target(eta_max0)
            # Degenerate inputs are answered with the uniform distribution; no
            # bisection work needed.
            skip = degenerate

        # ---- bracket expansion (reference's leading while loop) ----
        def exp_cond(c):
            _, _, lo, up, it = c
            need = jnp.logical_or(lo > 0.0, up < 0.0)
            return jnp.logical_and(
                it < _MAX_EXPAND_ITERS,
                jnp.logical_and(jnp.logical_not(skip), need))

        def exp_body(c):
            emin, emax, lo, up, it = c
            length = emax - emin
            go_lo = lo > 0.0
            emax1 = jnp.where(go_lo, emin, emax)
            emin1 = jnp.where(go_lo, emin - 2.0 * length, emin)
            go_up = up < 0.0
            emin2 = jnp.where(go_up, emax1, emin1)
            emax2 = jnp.where(go_up, emax1 + 2.0 * length, emax1)
            return emin2, emax2, target(emin2), target(emax2), it + 1

        emin_e, emax_e, _, _, _ = lax.while_loop(
            exp_cond, exp_body,
            (eta_min0, eta_max0, lower0, upper0, jnp.int32(0)))

        # ---- bisection with true early exit (reference's for loop) ----
        eta0 = 0.5 * (emin_e + emax_e)
        val0 = target(eta0)

        def bis_cond(c):
            _, _, _, val, it = c
            return jnp.logical_and(
                it < max_iter_eff,
                jnp.logical_and(jnp.logical_not(skip), jnp.abs(val) > tol_f))

        def bis_body(c):
            emin, emax, eta, val, it = c
            emax1 = jnp.where(val > 0.0, eta, emax)
            emin1 = jnp.where(val < 0.0, eta, emin)
            eta1 = 0.5 * (emin1 + emax1)
            return emin1, emax1, eta1, target(eta1), it + 1

        emin_b, emax_b, eta_b, val_b, _ = lax.while_loop(
            bis_cond, bis_body, (emin_e, emax_e, eta0, val0, jnp.int32(1)))

        converged = jnp.abs(val_b) <= tol_f
        emax_l = jnp.where(val_b > 0.0, eta_b, emax_b)
        emin_l = jnp.where(val_b < 0.0, eta_b, emin_b)
        eta_star = jnp.where(converged, eta_b, 0.5 * (emin_l + emax_l))

        if geometry == 'cvar':
            eta_star = jnp.where(skip, eta_min0, eta_star)

        p = p_fn(eta_star)
        if geometry == 'chi-square':
            p = jnp.where(degenerate, jnp.full_like(p, 1.0 / m_f), p)

        p_ref[...] = p

    return kernel


def _make_argmax_uniform_kernel(m, rows, cols):
    """chi-square branch: m <= 1 + 2*size -> mass on the argmax (ties split)."""
    m_f = float(m)

    def kernel(v_ref, p_ref):
        v = v_ref[...]
        valid = _valid_mask(rows, cols, m)
        v_max = jnp.max(v)
        v_min = jnp.min(jnp.where(valid, v, jnp.inf))
        is_max = jnp.logical_and(valid, v == v_max).astype(jnp.float32)
        p = is_max / jnp.sum(is_max)
        degenerate = jnp.logical_or(
            (v_max - v_min) / v_max <= MIN_REL_DIFFERENCE,
            v_max == v_min)
        p_ref[...] = jnp.where(degenerate, jnp.full_like(p, 1.0 / m_f), p)

    return kernel


def _call_kernel(kernel, v2d):
    # Full-array, no-grid kernel: v, p and a handful of temporaries live in
    # VMEM simultaneously.  Size the scoped-VMEM limit from the actual slab.
    # TODO(synk): for very large m (v7x has only 64 MiB physical VMEM) this
    # should be restructured as a grid over m-chunks with partial reductions.
    vmem_limit = int(min(64 * 1024 * 1024,
                         max(16 * 1024 * 1024, 12 * v2d.size * 4)))
    return pl.pallas_call(
        kernel,
        out_shape=jax.ShapeDtypeStruct(v2d.shape, jnp.float32),
        in_specs=[pl.BlockSpec(memory_space=pltpu.MemorySpace.VMEM)],
        out_specs=pl.BlockSpec(memory_space=pltpu.MemorySpace.VMEM),
        compiler_params=pltpu.CompilerParams(vmem_limit_bytes=vmem_limit),
    )(v2d)


class RobustLoss:
    """JAX/Pallas port of fairseq fast_dro RobustLoss (forward -> best response p)."""

    def __init__(self, size, reg, geometry, tol=1e-4, max_iter=1000, debugging=False):
        self.size = size
        self.reg = reg
        self.geometry = geometry
        self.tol = tol
        self.max_iter = max_iter
        self.debugging = debugging  # TODO(synk): debugging=True (returning eta_star) is not plumbed through the kernel.
        self.is_erm = size == 0
        if geometry not in GEOMETRIES:
            raise ValueError('Geometry %s not supported' % geometry)
        if geometry == 'cvar' and self.size > 1:
            raise ValueError(f'alpha should be < 1 for cvar, is {self.size}')

    def best_response(self, v, decayed_rho=None):
        size = decayed_rho if decayed_rho is not None else self.size
        m = int(v.shape[0])
        rows, cols = _slab_shape(m)

        if self.geometry == 'cvar':
            if self.reg > 0:
                if size == 1.0:
                    return jnp.full((m,), 1.0 / m, dtype=jnp.float32)
            else:
                # TODO(synk): cvar with reg == 0 requires an argsort/top-k scatter; no clean Pallas equivalent.
                raise NotImplementedError(
                    "cvar with reg == 0 is not implemented in the Pallas port")
        else:  # chi-square
            if size < float('inf') and m <= 1 + 2 * size:
                v2d = _to_slab(v, m)
                kernel = _make_argmax_uniform_kernel(m, rows, cols)
                return _call_kernel(kernel, v2d).reshape(-1)[:m]

        v2d = _to_slab(v, m)
        kernel = _make_best_response_kernel(
            m, rows, cols, self.geometry, size, self.reg, self.tol, self.max_iter)
        return _call_kernel(kernel, v2d).reshape(-1)[:m]

    def forward(self, v, decayed_rho=None):
        # reference computes the best response under torch.no_grad()
        return lax.stop_gradient(self.best_response(v, decayed_rho))

    __call__ = forward


if __name__ == "__main__":
    key = jax.random.PRNGKey(0)
    m = 8  # batch of per-example losses
    v = jnp.abs(jax.random.normal(key, (m,), dtype=jnp.float32)) + 0.1

    results = {}
    # chi^2 penalty (size = inf, reg > 0)
    results['chi2_penalty'] = RobustLoss(size=float('inf'), reg=0.1,
                                         geometry='chi-square')(v)
    # chi^2 constraint (finite size, reg > 0)
    results['chi2_constraint'] = RobustLoss(size=1.0, reg=0.01,
                                            geometry='chi-square')(v)
    # chi^2 constraint, unregularized (reg == 0)
    results['chi2_unreg'] = RobustLoss(size=1.0, reg=0.0,
                                       geometry='chi-square')(v)
    # chi^2 constraint with m <= 1 + 2*size -> argmax/uniform branch
    results['chi2_argmax'] = RobustLoss(size=4.0, reg=0.0,
                                        geometry='chi-square')(v)
    # CVaR with entropy regularization (reg > 0)
    results['cvar'] = RobustLoss(size=0.5, reg=0.05, geometry='cvar')(v)

    jax.block_until_ready(results)

    ok = True
    for name, p in results.items():
        p_np = np.asarray(p)
        if (not np.all(np.isfinite(p_np))) or abs(float(p_np.sum()) - 1.0) > 1e-2:
            ok = False
            print(f"BAD distribution for {name}: sum={p_np.sum()} p={p_np}")
    if ok:
        print("KERNEL_OK")
</pallas_src>

<mosaic_0001>
module attributes {stable_mosaic.version = 11 : i64} {
  func.func @kernel(%arg0: memref<8x128xf32, #tpu.memory_space<vmem>>, %arg1: memref<8x128xf32, #tpu.memory_space<vmem>>) attributes {dimension_semantics = [], scalar_prefetch = 0 : i64, scratch_operands = 0 : i64, tpu.core_type = #tpu.core_type<tc>} {
    %c0 = arith.constant 0 : index
    %c0_0 = arith.constant 0 : index
    %0 = vector.load %arg0[%c0, %c0_0] : memref<8x128xf32, #tpu.memory_space<vmem>>, vector<8x128xf32>
    %1 = vector.shape_cast %0 : vector<8x128xf32> to vector<1x8x128xf32>
    %cst = arith.constant dense<0xFF800000> : vector<1xf32>
    %2 = vector.multi_reduction <maximumf>, %1, %cst [1, 2] : vector<1x8x128xf32> to vector<1xf32>
    %3 = vector.shape_cast %2 : vector<1xf32> to vector<1x1x1xf32>
    %4 = vector.extract %3[0, 0, 0] : f32 from vector<1x1x1xf32>
    %5 = tpu.iota {dimensions = array<i32: 0>} : vector<8x128xi32>
    %6 = tpu.iota {dimensions = array<i32: 1>} : vector<8x128xi32>
    %c128_i32 = arith.constant 128 : i32
    %7 = vector.broadcast %c128_i32 : i32 to vector<8x128xi32>
    %8 = arith.muli %5, %7 : vector<8x128xi32>
    %9 = arith.addi %8, %6 : vector<8x128xi32>
    %c8_i32 = arith.constant 8 : i32
    %10 = vector.broadcast %c8_i32 : i32 to vector<8x128xi32>
    %11 = arith.cmpi slt, %9, %10 : vector<8x128xi32>
    %cst_1 = arith.constant 0x7F800000 : f32
    %12 = vector.broadcast %cst_1 : f32 to vector<8x128xf32>
    %13 = arith.select %11, %0, %12 : vector<8x128xi1>, vector<8x128xf32>
    %14 = vector.shape_cast %13 : vector<8x128xf32> to vector<1x8x128xf32>
    %cst_2 = arith.constant dense<0x7F800000> : vector<1xf32>
    %15 = vector.multi_reduction <minimumf>, %14, %cst_2 [1, 2] : vector<1x8x128xf32> to vector<1xf32>
    %16 = vector.shape_cast %15 : vector<1xf32> to vector<1x1x1xf32>
    %17 = vector.extract %16[0, 0, 0] : f32 from vector<1x1x1xf32>
    %cst_3 = arith.constant 0.000000e+00 : f32
    %18 = vector.broadcast %cst_3 : f32 to vector<8x128xf32>
    %19 = arith.select %11, %0, %18 : vector<8x128xi1>, vector<8x128xf32>
    %20 = vector.shape_cast %19 : vector<8x128xf32> to vector<1x8x128xf32>
    %cst_4 = arith.constant dense<0.000000e+00> : vector<1xf32>
    %21 = vector.multi_reduction <add>, %20, %cst_4 [1, 2] : vector<1x8x128xf32> to vector<1xf32>
    %22 = vector.shape_cast %21 : vector<1xf32> to vector<1x1x1xf32>
    %23 = vector.extract %22[0, 0, 0] : f32 from vector<1x1x1xf32>
    %24 = arith.subf %4, %17 : f32
    %25 = arith.divf %24, %4 : f32
    %cst_5 = arith.constant 9.99999974E-6 : f32
    %26 = arith.cmpf ole, %25, %cst_5 : f32
    %27 = arith.cmpf oeq, %4, %17 : f32
    %28 = arith.ori %26, %27 : i1
    %cst_6 = arith.constant 8.000000e-01 : f32
    %29 = arith.subf %23, %cst_6 : f32
    %30 = arith.minimumf %29, %17 : f32
    %31 = vector.broadcast %30 : f32 to vector<8x128xf32>
    %32 = arith.subf %0, %31 : vector<8x128xf32>
    %cst_7 = arith.constant 0.000000e+00 : f32
    %33 = vector.broadcast %cst_7 : f32 to vector<8x128xf32>
    %34 = arith.maximumf %32, %33 : vector<8x128xf32>
    %35 = vector.shape_cast %34 : vector<8x128xf32> to vector<1x8x128xf32>
    %cst_8 = arith.constant dense<0.000000e+00> : vector<1xf32>
    %36 = vector.multi_reduction <add>, %35, %cst_8 [1, 2] : vector<1x8x128xf32> to vector<1xf32>
    %37 = vector.shape_cast %36 : vector<1xf32> to vector<1x1x1xf32>
    %38 = vector.extract %37[0, 0, 0] : f32 from vector<1x1x1xf32>
    %cst_9 = arith.constant 1.250000e+00 : f32
    %39 = arith.mulf %38, %cst_9 : f32
    %cst_10 = arith.constant 1.000000e+00 : f32
    %40 = arith.subf %cst_10, %39 : f32
    %41 = vector.broadcast %4 : f32 to vector<8x128xf32>
    %42 = arith.subf %0, %41 : vector<8x128xf32>
    %cst_11 = arith.constant 0.000000e+00 : f32
    %43 = vector.broadcast %cst_11 : f32 to vector<8x128xf32>
    %44 = arith.maximumf %42, %43 : vector<8x128xf32>
    %45 = vector.shape_cast %44 : vector<8x128xf32> to vector<1x8x128xf32>
    %cst_12 = arith.constant dense<0.000000e+00> : vector<1xf32>
    %46 = vector.multi_reduction <add>, %45, %cst_12 [1, 2] : vector<1x8x128xf32> to vector<1xf32>
    %47 = vector.shape_cast %46 : vector<1xf32> to vector<1x1x1xf32>
    %48 = vector.extract %47[0, 0, 0] : f32 from vector<1x1x1xf32>
    %cst_13 = arith.constant 1.250000e+00 : f32
    %49 = arith.mulf %48, %cst_13 : f32
    %cst_14 = arith.constant 1.000000e+00 : f32
    %50 = arith.subf %cst_14, %49 : f32
    %cst_15 = arith.constant 1.250000e+00 : f32
    %c0_i32 = arith.constant 0 : i32
    %51:5 = scf.while (%arg2 = %30, %arg3 = %4, %arg4 = %40, %arg5 = %50, %arg6 = %c0_i32) : (f32, f32, f32, f32, i32) -> (f32, f32, f32, f32, i32) {
      %cst_31 = arith.constant 0.000000e+00 : f32
      %83 = arith.cmpf ogt, %arg4, %cst_31 : f32
      %cst_32 = arith.constant 0.000000e+00 : f32
      %84 = arith.cmpf olt, %arg5, %cst_32 : f32
      %85 = arith.ori %83, %84 : i1
      %c128_i32_33 = arith.constant 128 : i32
      %86 = arith.cmpi slt, %arg6, %c128_i32_33 : i32
      %true = arith.constant true
      %87 = arith.xori %28, %true : i1
      %88 = arith.andi %87, %85 : i1
      %89 = arith.andi %86, %88 : i1
      scf.condition(%89) %arg2, %arg3, %arg4, %arg5, %arg6 : f32, f32, f32, f32, i32
    } do {
    ^bb0(%arg2: f32, %arg3: f32, %arg4: f32, %arg5: f32, %arg6: i32):
      %83 = arith.subf %arg3, %arg2 : f32
      %cst_31 = arith.constant 0.000000e+00 : f32
      %84 = arith.cmpf ogt, %arg4, %cst_31 : f32
      %85 = arith.select %84, %arg2, %arg3 : f32
      %cst_32 = arith.constant 2.000000e+00 : f32
      %86 = arith.mulf %cst_32, %83 : f32
      %87 = arith.subf %arg2, %86 : f32
      %88 = arith.select %84, %87, %arg2 : f32
      %cst_33 = arith.constant 0.000000e+00 : f32
      %89 = arith.cmpf olt, %arg5, %cst_33 : f32
      %90 = arith.select %89, %85, %88 : f32
      %cst_34 = arith.constant 2.000000e+00 : f32
      %91 = arith.mulf %cst_34, %83 : f32
      %92 = arith.addf %85, %91 : f32
      %93 = arith.select %89, %92, %85 : f32
      %94 = vector.broadcast %90 : f32 to vector<8x128xf32>
      %95 = arith.subf %0, %94 : vector<8x128xf32>
      %cst_35 = arith.constant 0.000000e+00 : f32
      %96 = vector.broadcast %cst_35 : f32 to vector<8x128xf32>
      %97 = arith.maximumf %95, %96 : vector<8x128xf32>
      %98 = vector.shape_cast %97 : vector<8x128xf32> to vector<1x8x128xf32>
      %cst_36 = arith.constant dense<0.000000e+00> : vector<1xf32>
      %99 = vector.multi_reduction <add>, %98, %cst_36 [1, 2] : vector<1x8x128xf32> to vector<1xf32>
      %100 = vector.shape_cast %99 : vector<1xf32> to vector<1x1x1xf32>
      %101 = vector.extract %100[0, 0, 0] : f32 from vector<1x1x1xf32>
      %102 = arith.mulf %101, %cst_15 : f32
      %cst_37 = arith.constant 1.000000e+00 : f32
      %103 = arith.subf %cst_37, %102 : f32
      %104 = vector.broadcast %93 : f32 to vector<8x128xf32>
      %105 = arith.subf %0, %104 : vector<8x128xf32>
      %cst_38 = arith.constant 0.000000e+00 : f32
      %106 = vector.broadcast %cst_38 : f32 to vector<8x128xf32>
      %107 = arith.maximumf %105, %106 : vector<8x128xf32>
      %108 = vector.shape_cast %107 : vector<8x128xf32> to vector<1x8x128xf32>
      %cst_39 = arith.constant dense<0.000000e+00> : vector<1xf32>
      %109 = vector.multi_reduction <add>, %108, %cst_39 [1, 2] : vector<1x8x128xf32> to vector<1xf32>
      %110 = vector.shape_cast %109 : vector<1xf32> to vector<1x1x1xf32>
      %111 = vector.extract %110[0, 0, 0] : f32 from vector<1x1x1xf32>
      %112 = arith.mulf %111, %cst_15 : f32
      %cst_40 = arith.constant 1.000000e+00 : f32
      %113 = arith.subf %cst_40, %112 : f32
      %c1_i32_41 = arith.constant 1 : i32
      %114 = arith.addi %arg6, %c1_i32_41 : i32
      scf.yield %90, %93, %103, %113, %114 : f32, f32, f32, f32, i32
    }
    %52 = arith.addf %51#0, %51#1 : f32
    %cst_16 = arith.constant 5.000000e-01 : f32
    %53 = arith.mulf %cst_16, %52 : f32
    %54 = vector.broadcast %53 : f32 to vector<8x128xf32>
    %55 = arith.subf %0, %54 : vector<8x128xf32>
    %cst_17 = arith.constant 0.000000e+00 : f32
    %56 = vector.broadcast %cst_17 : f32 to vector<8x128xf32>
    %57 = arith.maximumf %55, %56 : vector<8x128xf32>
    %58 = vector.shape_cast %57 : vector<8x128xf32> to vector<1x8x128xf32>
    %cst_18 = arith.constant dense<0.000000e+00> : vector<1xf32>
    %59 = vector.multi_reduction <add>, %58, %cst_18 [1, 2] : vector<1x8x128xf32> to vector<1xf32>
    %60 = vector.shape_cast %59 : vector<1xf32> to vector<1x1x1xf32>
    %61 = vector.extract %60[0, 0, 0] : f32 from vector<1x1x1xf32>
    %cst_19 = arith.constant 1.250000e+00 : f32
    %62 = arith.mulf %61, %cst_19 : f32
    %cst_20 = arith.constant 1.000000e+00 : f32
    %63 = arith.subf %cst_20, %62 : f32
    %cst_21 = arith.constant 1.250000e+00 : f32
    %c1_i32 = arith.constant 1 : i32
    %64:5 = scf.while (%arg2 = %51#0, %arg3 = %51#1, %arg4 = %53, %arg5 = %63, %arg6 = %c1_i32) : (f32, f32, f32, f32, i32) -> (f32, f32, f32, f32, i32) {
      %c64_i32 = arith.constant 64 : i32
      %83 = arith.cmpi slt, %arg6, %c64_i32 : i32
      %true = arith.constant true
      %84 = arith.xori %28, %true : i1
      %85 = math.absf %arg5 : f32
      %cst_31 = arith.constant 9.99999974E-5 : f32
      %86 = arith.cmpf ogt, %85, %cst_31 : f32
      %87 = arith.andi %84, %86 : i1
      %88 = arith.andi %83, %87 : i1
      scf.condition(%88) %arg2, %arg3, %arg4, %arg5, %arg6 : f32, f32, f32, f32, i32
    } do {
    ^bb0(%arg2: f32, %arg3: f32, %arg4: f32, %arg5: f32, %arg6: i32):
      %cst_31 = arith.constant 0.000000e+00 : f32
      %83 = arith.cmpf ogt, %arg5, %cst_31 : f32
      %84 = arith.select %83, %arg4, %arg3 : f32
      %cst_32 = arith.constant 0.000000e+00 : f32
      %85 = arith.cmpf olt, %arg5, %cst_32 : f32
      %86 = arith.select %85, %arg4, %arg2 : f32
      %87 = arith.addf %86, %84 : f32
      %cst_33 = arith.constant 5.000000e-01 : f32
      %88 = arith.mulf %cst_33, %87 : f32
      %89 = vector.broadcast %88 : f32 to vector<8x128xf32>
      %90 = arith.subf %0, %89 : vector<8x128xf32>
      %cst_34 = arith.constant 0.000000e+00 : f32
      %91 = vector.broadcast %cst_34 : f32 to vector<8x128xf32>
      %92 = arith.maximumf %90, %91 : vector<8x128xf32>
      %93 = vector.shape_cast %92 : vector<8x128xf32> to vector<1x8x128xf32>
      %cst_35 = arith.constant dense<0.000000e+00> : vector<1xf32>
      %94 = vector.multi_reduction <add>, %93, %cst_35 [1, 2] : vector<1x8x128xf32> to vector<1xf32>
      %95 = vector.shape_cast %94 : vector<1xf32> to vector<1x1x1xf32>
      %96 = vector.extract %95[0, 0, 0] : f32 from vector<1x1x1xf32>
      %97 = arith.mulf %96, %cst_21 : f32
      %cst_36 = arith.constant 1.000000e+00 : f32
      %98 = arith.subf %cst_36, %97 : f32
      %c1_i32_37 = arith.constant 1 : i32
      %99 = arith.addi %arg6, %c1_i32_37 : i32
      scf.yield %86, %84, %88, %98, %99 : f32, f32, f32, f32, i32
    }
    %65 = math.absf %64#3 : f32
    %cst_22 = arith.constant 9.99999974E-5 : f32
    %66 = arith.cmpf ole, %65, %cst_22 : f32
    %cst_23 = arith.constant 0.000000e+00 : f32
    %67 = arith.cmpf ogt, %64#3, %cst_23 : f32
    %68 = arith.select %67, %64#2, %64#1 : f32
    %cst_24 = arith.constant 0.000000e+00 : f32
    %69 = arith.cmpf olt, %64#3, %cst_24 : f32
    %70 = arith.select %69, %64#2, %64#0 : f32
    %71 = arith.addf %70, %68 : f32
    %cst_25 = arith.constant 5.000000e-01 : f32
    %72 = arith.mulf %cst_25, %71 : f32
    %73 = arith.select %66, %64#2, %72 : f32
    %74 = vector.broadcast %73 : f32 to vector<8x128xf32>
    %75 = arith.subf %0, %74 : vector<8x128xf32>
    %cst_26 = arith.constant 0.000000e+00 : f32
    %76 = vector.broadcast %cst_26 : f32 to vector<8x128xf32>
    %77 = arith.maximumf %75, %76 : vector<8x128xf32>
    %cst_27 = arith.constant 1.250000e+00 : f32
    %78 = vector.broadcast %cst_27 : f32 to vector<8x128xf32>
    %79 = arith.mulf %77, %78 : vector<8x128xf32>
    %cst_28 = arith.constant 1.250000e-01 : f32
    %80 = vector.broadcast %cst_28 : f32 to vector<8x128xf32>
    %81 = arith.select %28, %80, %79 : vector<8x128xf32>
    %c0_29 = arith.constant 0 : index
    %c0_30 = arith.constant 0 : index
    %82 = vector.load %arg1[%c0_29, %c0_30] : memref<8x128xf32, #tpu.memory_space<vmem>>, vector<8x128xf32>
    tpu.vector_store %arg1[%c0_29, %c0_30], %81 {strides = array<i32>} : memref<8x128xf32, #tpu.memory_space<vmem>>, vector<8x128xf32>,
    return
  }
}

</mosaic_0001>

<llo_original>
// kernel: tpu_custom_call.1
$region0: #{tpu_custom_call.1}
  #allocation0 [shape = 'u32[]', space=smem, size = 0x4, offset = 0x4, fixed_abs, tag = 'smem constant byte address 0x4 - core index']
  #allocation1 [shape = 'u32[144,128]{1,0:T(1,128)}', space=vmem, size = 0x12000, scoped, tag = 'internal scratch']
  %s0 = inlined_call_operand.hbm [shape: f32[8,128], index: 0, kind: input, shape index: {}]
  %s1 = inlined_call_operand.hbm [shape: f32[8,128], index: 1, kind: output, shape index: {}]
  %s2 = sld [smem:[#allocation0]]
  $region32: #{tpu_custom_call.1} parent=0
    _
  %s4 = ssub.s32 1, %s2
  %s5 = scalar_select 0, %s4, %s2
  $region1: #{tpu_custom_call.1} parent=0
    #allocation2 [shape = 'u8[4096]{0}', space=vmem, size = 0x1000, scoped, tag = 'input window, operand 0, single buffered']
    #allocation3 [shape = 's32[1]{0}', space=sflag, size = 0x4, scoped, tag = 'scoped memory for tpu_custom_call.1']
    #allocation4 [shape = 's32[1]{0}', space=sflag, size = 0x4, scoped, tag = 'scoped memory for tpu_custom_call.1']
    #allocation5 [shape = 'u8[4096]{0}', space=vmem, size = 0x1000, scoped, tag = 'output window, operand 0, single buffered']
    %6 = vsyncpa [#allocation3], 0
    %7 = vsyncpa [#allocation4], 0
    // Predicated region
    $region2: #{tpu_custom_call.1} parent=1 // pred_check
      _
    $region3: #{tpu_custom_call.1} parent=1 // pred_check_branch
      %9 = sbr.rel (0) target = $region5
    $region4: #{tpu_custom_call.1} parent=1 // pred_region
      %s11 = ssub.s32 128, 128
      %12 = vsyncadd [#allocation3], %s11
      %s14 = sshll.u32 [#allocation2], 4
      %s15 = int_to_ptr.vmem [resolvable:$true] %s14
      %17 = dma.hbm_to_vmem [thread:$0]  %s0, 128, %s15, [#allocation3]
    $region5: #{tpu_custom_call.1} parent=1 // pred_fallthru
      _
    // Predicated region
    $region6: #{tpu_custom_call.1} parent=1 // pred_check
      _
    $region7: #{tpu_custom_call.1} parent=1 // pred_check_branch
      %19 = sbr.rel (0) target = $region9
    $region8: #{tpu_custom_call.1} parent=1 // pred_region
      %20 = dma.done [#allocation3], 128
    $region9: #{tpu_custom_call.1} parent=1 // pred_fallthru
      _
    %v21 = vld [vmem:[#allocation2] sm:$0xff]
    %22 = vmax.xlane.f32.xlu0 %v21
    %v23 = vpop.xlane.xlu0 %22
    %v24 = vrot.slane %v23, 4
    %v25 = vmax.f32 %v23, %v24
    %v26 = vrot.slane %v25, 2
    %v27 = vmax.f32 %v25, %v26
    %v28 = vrot.slane %v27, 1
    %v29 = vmax.f32 %v27, %v28
    %s30 = vtos %v29
    %v31 = vlaneseq
    %v32 = vshrl.u32 %v31, 7
    %v33 = vlaneseq
    %v34 = vand.u32 %v33, 127
    %v35 = vmul.u32 %v32, 128
    %v36 = vadd.s32 %v35, %v34
    %vm37 = vcmp.lt.s32.totalorder %v36, 8
    %v38 = vsel %vm37, %v21, inf
    %39 = vmin.xlane.f32.xlu0 %v38
    %v40 = vpop.xlane.xlu0 %39
    %v41 = vrot.slane %v40, 4
    %v42 = vmin.f32 %v40, %v41
    %v43 = vrot.slane %v42, 2
    %v44 = vmin.f32 %v42, %v43
    %v45 = vrot.slane %v44, 1
    %v46 = vmin.f32 %v44, %v45
    %s47 = vtos %v46
    %v48 = vsel %vm37, %v21, 0.0
    %49 = vadd.xlane.f32.xlu0 %v48
    %v50 = vpop.xlane.xlu0 %49
    %v51 = vrot.slane %v50, 4
    %v52 = vadd.f32 %v50, %v51
    %v53 = vrot.slane %v52, 2
    %v54 = vadd.f32 %v52, %v53
    %v55 = vrot.slane %v54, 1
    %v56 = vadd.f32 %v54, %v55
    %s57 = vtos %v56
    %s58 = ssub.f32 %s30, %s47
    %v59 = vstv %s30
    %v60 = vrcp.pop %v59
    %s61 = vtos %v60
    %s62 = smul.f32 %s58, %s61
    %p63 = scmp.le.f32.partialorder %s62, 1e-05
    %p64 = scmp.eq.f32.partialorder %s30, %s47
    %p65 = por %p63, %p64
    %s66 = ssub.f32 %s57, 0.8
    %s67 = smin.f32 %s66, %s47
    %v68 = vstv %s67
    %v69 = vsub.f32 %v21, %v68
    %v70 = vmax.f32 %v69, 0.0
    %71 = vadd.xlane.f32.xlu0 %v70
    %v72 = vpop.xlane.xlu0 %71
    %v73 = vrot.slane %v72, 4
    %v74 = vadd.f32 %v72, %v73
    %v75 = vrot.slane %v74, 2
    %v76 = vadd.f32 %v74, %v75
    %v77 = vrot.slane %v76, 1
    %v78 = vadd.f32 %v76, %v77
    %s79 = vtos %v78
    %s80 = smul.f32 %s79, 1.25
    %s81 = ssub.f32 1.0, %s80
    %v82 = vstv %s30
    %v83 = vsub.f32 %v21, %v82
    %v84 = vmax.f32 %v83, 0.0
    %85 = vadd.xlane.f32.xlu0 %v84
    %v86 = vpop.xlane.xlu0 %85
    %v87 = vrot.slane %v86, 4
    %v88 = vadd.f32 %v86, %v87
    %v89 = vrot.slane %v88, 2
    %v90 = vadd.f32 %v88, %v89
    %v91 = vrot.slane %v90, 1
    %v92 = vadd.f32 %v90, %v91
    %s93 = vtos %v92
    %s94 = smul.f32 %s93, 1.25
    %s95 = ssub.f32 1.0, %s94
    // While loop
    $region10: #{tpu_custom_call.1} parent=1 // loop_pre_header
      _
    $region11: #{tpu_custom_call.1} parent=1 // loop_header
      %s97 = sphi %s67, %s120
      %s98 = sphi %s30, %s122
      %s99 = sphi %s81, %s136
      %s100 = sphi %s95, %s150
      %s101 = sphi 0, %s151
      %p102 = scmp.gt.f32.partialorder %s99, 0.0
      %p103 = scmp.lt.f32.partialorder %s100, 0.0
      %p104 = por %p102, %p103
      %p105 = scmp.lt.s32.totalorder %s101, 128
      %p106 = pneg %p65
      %p107 = pnand %p106, %p104
      %p108 = pneg %p107
      %p109 = pnand %p105, %p108
      %p110 = pneg %p109
    $region12: #{tpu_custom_call.1} parent=1 // loop_header_branch
      %112 = sbr.rel (%p109) target = $region16
    $region13: #{tpu_custom_call.1} parent=1 // loop_body
      %s113 = ssub.f32 %s98, %s97
      %p114 = scmp.gt.f32.partialorder %s99, 0.0
      %s115 = scalar_select %p114, %s97, %s98
      %s116 = smul.f32 %s113, 2.0
      %s117 = ssub.f32 %s97, %s116
      %s118 = scalar_select %p114, %s117, %s97
      %p119 = scmp.lt.f32.partialorder %s100, 0.0
      %s120 = scalar_select %p119, %s115, %s118
      %s121 = sadd.f32 %s115, %s116
      %s122 = scalar_select %p119, %s121, %s115
      %v123 = vstv %s120
      %v124 = vsub.f32 %v21, %v123
      %v125 = vmax.f32 %v124, 0.0
      %126 = vadd.xlane.f32.xlu0 %v125
      %v127 = vpop.xlane.xlu0 %126
      %v128 = vrot.slane %v127, 4
      %v129 = vadd.f32 %v127, %v128
      %v130 = vrot.slane %v129, 2
      %v131 = vadd.f32 %v129, %v130
      %v132 = vrot.slane %v131, 1
      %v133 = vadd.f32 %v131, %v132
      %s134 = vtos %v133
      %s135 = smul.f32 %s134, 1.25
      %s136 = ssub.f32 1.0, %s135
      %v137 = vstv %s122
      %v138 = vsub.f32 %v21, %v137
      %v139 = vmax.f32 %v138, 0.0
      %140 = vadd.xlane.f32.xlu0 %v139
      %v141 = vpop.xlane.xlu0 %140
      %v142 = vrot.slane %v141, 4
      %v143 = vadd.f32 %v141, %v142
      %v144 = vrot.slane %v143, 2
      %v145 = vadd.f32 %v143, %v144
      %v146 = vrot.slane %v145, 1
      %v147 = vadd.f32 %v145, %v146
      %s148 = vtos %v147
      %s149 = smul.f32 %s148, 1.25
      %s150 = ssub.f32 1.0, %s149
      %s151 = sadd.s32 %s101, 1
    $region14: #{tpu_custom_call.1} parent=1 // loop_footer
      _
    $region15: #{tpu_custom_call.1} parent=1 // loop_footer_branch
      %96 = sbr.rel target = $region11
    $region16: #{tpu_custom_call.1} parent=1 // loop_exit
      _
    %s152 = sadd.f32 %s97, %s98
    %s153 = smul.f32 %s152, 0.5
    %v154 = vstv %s153
    %v155 = vsub.f32 %v21, %v154
    %v156 = vmax.f32 %v155, 0.0
    %157 = vadd.xlane.f32.xlu0 %v156
    %v158 = vpop.xlane.xlu0 %157
    %v159 = vrot.slane %v158, 4
    %v160 = vadd.f32 %v158, %v159
    %v161 = vrot.slane %v160, 2
    %v162 = vadd.f32 %v160, %v161
    %v163 = vrot.slane %v162, 1
    %v164 = vadd.f32 %v162, %v163
    %s165 = vtos %v164
    %s166 = smul.f32 %s165, 1.25
    %s167 = ssub.f32 1.0, %s166
    // While loop
    $region17: #{tpu_custom_call.1} parent=1 // loop_pre_header
      _
    $region18: #{tpu_custom_call.1} parent=1 // loop_header
      %s169 = sphi %s97, %s187
      %s170 = sphi %s98, %s185
      %s171 = sphi %s153, %s189
      %s172 = sphi %s167, %s203
      %s173 = sphi 1, %s204
      %p174 = scmp.lt.s32.totalorder %s173, 64
      %p175 = pneg %p65
      %s176 = sand.u32 2147483647, %s172
      %p177 = scmp.gt.f32.partialorder %s176, 0.0001
      %p178 = pnand %p175, %p177
      %p179 = pneg %p178
      %p180 = pnand %p174, %p179
      %p181 = pneg %p180
    $region19: #{tpu_custom_call.1} parent=1 // loop_header_branch
      %183 = sbr.rel (%p180) target = $region23
    $region20: #{tpu_custom_call.1} parent=1 // loop_body
      %p184 = scmp.gt.f32.partialorder %s172, 0.0
      %s185 = scalar_select %p184, %s171, %s170
      %p186 = scmp.lt.f32.partialorder %s172, 0.0
      %s187 = scalar_select %p186, %s171, %s169
      %s188 = sadd.f32 %s187, %s185
      %s189 = smul.f32 %s188, 0.5
      %v190 = vstv %s189
      %v191 = vsub.f32 %v21, %v190
      %v192 = vmax.f32 %v191, 0.0
      %193 = vadd.xlane.f32.xlu0 %v192
      %v194 = vpop.xlane.xlu0 %193
      %v195 = vrot.slane %v194, 4
      %v196 = vadd.f32 %v194, %v195
      %v197 = vrot.slane %v196, 2
      %v198 = vadd.f32 %v196, %v197
      %v199 = vrot.slane %v198, 1
      %v200 = vadd.f32 %v198, %v199
      %s201 = vtos %v200
      %s202 = smul.f32 %s201, 1.25
      %s203 = ssub.f32 1.0, %s202
      %s204 = sadd.s32 %s173, 1
    $region21: #{tpu_custom_call.1} parent=1 // loop_footer
      _
    $region22: #{tpu_custom_call.1} parent=1 // loop_footer_branch
      %168 = sbr.rel target = $region18
    $region23: #{tpu_custom_call.1} parent=1 // loop_exit
      _
    %s205 = sand.u32 2147483647, %s172
    %p206 = scmp.le.f32.partialorder %s205, 0.0001
    %p207 = scmp.gt.f32.partialorder %s172, 0.0
    %s208 = scalar_select %p207, %s171, %s170
    %p209 = scmp.lt.f32.partialorder %s172, 0.0
    %s210 = scalar_select %p209, %s171, %s169
    %s211 = sadd.f32 %s210, %s208
    %s212 = smul.f32 %s211, 0.5
    %s213 = scalar_select %p206, %s171, %s212
    %v214 = vstv %s213
    %v215 = vsub.f32 %v21, %v214
    %v216 = vmax.f32 %v215, 0.0
    %v217 = vmul.f32 %v216, 1.25
    %s218 = scalar_select %p65, 1, 0
    %v219 = vstv %s218
    %vm220 = vcmp.eq.s32.totalorder %v219, 1
    %v221 = vsel %vm220, 0.125, %v217
    %222 = vst [vmem:[#allocation5] sm:$0xff] %v221
    // Predicated region
    $region24: #{tpu_custom_call.1} parent=1 // pred_check
      _
    $region25: #{tpu_custom_call.1} parent=1 // pred_check_branch
      %224 = sbr.rel (0) target = $region27
    $region26: #{tpu_custom_call.1} parent=1 // pred_region
      %s226 = ssub.s32 128, 128
      %227 = vsyncadd [#allocation4], %s226
      %s229 = sshll.u32 [#allocation5], 4
      %s230 = int_to_ptr.vmem [resolvable:$true] %s229
      %232 = dma.vmem_to_hbm [thread:$0]  %s230, 128, %s1, [#allocation4]
    $region27: #{tpu_custom_call.1} parent=1 // pred_fallthru
      _
    // Predicated region
    $region28: #{tpu_custom_call.1} parent=1 // pred_check
      _
    $region29: #{tpu_custom_call.1} parent=1 // pred_check_branch
      %234 = sbr.rel (0) target = $region31
    $region30: #{tpu_custom_call.1} parent=1 // pred_region
      %235 = dma.done [#allocation4], 128
    $region31: #{tpu_custom_call.1} parent=1 // pred_fallthru
      _
    %236 = vsyncpa [#allocation3], 1
    %237 = vsyncpa [#allocation4], 1

</llo_original>
